<compile_context>
chip_gen: v5e
topology: v5e:2x2
jax: 0.10.0
libtpu: 0.0.40
codegen_flags: <defaults>
</compile_context>

<pallas_src>
import jax
import jax.numpy as jnp
from jax.experimental import pallas as pl
from jax.experimental.pallas import tpu as pltpu


def _focal_kernel(pred_ref, gt_ref, mask_ref, out_ref):
    # pred_ref/gt_ref: (1, CB, HW) native dtype; mask_ref: (1, 1, HW) f32
    pred = pred_ref[...].astype(jnp.float32)
    gt = gt_ref[...].astype(jnp.float32)
    m = mask_ref[...]                       # broadcasts over the channel axis

    pos_inds = (gt == 1.0).astype(jnp.float32)
    neg_inds = (gt < 1.0).astype(jnp.float32)

    one_minus_gt = 1.0 - gt
    neg_w = one_minus_gt * one_minus_gt
    neg_w = neg_w * neg_w                   # (1 - gt)^4

    one_minus_pred = 1.0 - pred
    # pos/neg branches are disjoint -> a single log per element; also avoids
    # 0 * (-inf) = NaN when pred hits exactly 0 or 1 on the unused branch.
    lg = jnp.log(jnp.where(gt == 1.0, pred, one_minus_pred))

    pos_m = pos_inds * m
    neg_m = neg_inds * m
    pos_loss = lg * (one_minus_pred * one_minus_pred) * pos_m
    neg_loss = lg * (pred * pred) * neg_w * neg_m

    pos_s = jnp.sum(pos_loss)
    neg_s = jnp.sum(neg_loss)
    npos_s = jnp.sum(pos_m)

    # Pack the three partial sums into a lane-dense (8,128) tile:
    #   row 0 -> pos_loss, row 1 -> neg_loss, row 2 -> num_pos, rest zeros.
    row = jax.lax.broadcasted_iota(jnp.int32, (8, 128), 0)
    tile = jnp.where(row == 0, pos_s,
                     jnp.where(row == 1, neg_s,
                               jnp.where(row == 2, npos_s, 0.0)))
    out_ref[0, 0] = tile


def _pick_channel_block(C, HW, itemsize, budget=2 * 1024 * 1024):
    """Largest channel block that divides C, keeps tiles <= budget bytes and
    respects the (8,128) block-shape rule (multiple of 8 or the full dim)."""
    if C * HW * itemsize <= budget:
        return C
    for d in range(C, 0, -1):
        if C % d == 0 and d % 8 == 0 and d * HW * itemsize <= budget:
            return d
    # No aligned divisor fits the budget; fall back to the full (always legal)
    # channel extent — still correct, just uses more VMEM.
    return C


def focal_loss_centernet(pred, gt, mask=None):
    """pred, gt: (B, C, H, W); mask: optional (B, H, W)."""
    B, C, H, W = pred.shape
    HW = H * W

    # Reshape only — no dtype cast of pred/gt in the wrapper (keeps gt's exact
    # values for the `gt == 1` test and halves HBM bytes for bf16 inputs).
    pred3d = pred.reshape(B, C, HW)
    gt3d = gt.reshape(B, C, HW)

    if mask is None:
        mask3d = jnp.ones((1, 1, HW), dtype=jnp.float32)
        mask_index_map = lambda b, c: (0, 0, 0)
    else:
        mask3d = mask.astype(jnp.float32).reshape(B, 1, HW)
        mask_index_map = lambda b, c: (b, 0, 0)

    itemsize = max(pred3d.dtype.itemsize, gt3d.dtype.itemsize)
    cb = _pick_channel_block(C, HW, itemsize)
    nc = C // cb

    data_spec = pl.BlockSpec((1, cb, HW), lambda b, c: (b, c, 0))
    mask_spec = pl.BlockSpec((1, 1, HW), mask_index_map)
    out_spec = pl.BlockSpec((1, 1, 8, 128), lambda b, c: (b, c, 0, 0))

    partials = pl.pallas_call(
        _focal_kernel,
        out_shape=jax.ShapeDtypeStruct((B, nc, 8, 128), jnp.float32),
        grid_spec=pltpu.PrefetchScalarGridSpec(
            num_scalar_prefetch=0,
            grid=(B, nc),
            in_specs=[data_spec, data_spec, mask_spec],
            out_specs=out_spec,
        ),
        compiler_params=pltpu.CompilerParams(
            dimension_semantics=("parallel", "parallel")),
    )(pred3d, gt3d, mask3d)

    # Reduce the tiny per-block partials in plain JAX.
    sums = jnp.sum(partials, axis=(0, 1))      # (8, 128)
    pos_loss = sums[0, 0]
    neg_loss = sums[1, 0]
    num_pos = sums[2, 0]

    safe_num_pos = jnp.where(num_pos == 0, 1.0, num_pos)
    loss = jnp.where(num_pos == 0,
                     -neg_loss,
                     -(pos_loss + neg_loss) / safe_num_pos)
    return loss


def _reference_jax(pred, gt, mask=None):
    pred = pred.astype(jnp.float32)
    gt = gt.astype(jnp.float32)
    pos_inds = (gt == 1.0).astype(jnp.float32)
    neg_inds = (gt < 1.0).astype(jnp.float32)
    neg_weights = (1.0 - gt) ** 4
    pos_loss = jnp.log(pred) * (1.0 - pred) ** 2 * pos_inds
    neg_loss = jnp.log(1.0 - pred) * pred ** 2 * neg_weights * neg_inds
    if mask is not None:
        m = mask.astype(jnp.float32)[:, None, :, :]
        pos_loss = pos_loss * m
        neg_loss = neg_loss * m
        num_pos = (pos_inds * m).sum()
    else:
        num_pos = pos_inds.sum()
    pos_loss = pos_loss.sum()
    neg_loss = neg_loss.sum()
    return jnp.where(num_pos == 0, -neg_loss,
                     -(pos_loss + neg_loss) / jnp.where(num_pos == 0, 1.0, num_pos))


if __name__ == "__main__":
    key = jax.random.PRNGKey(0)
    B, C, H, W = 2, 4, 16, 16
    k1, k2, k3 = jax.random.split(key, 3)

    # pred: sigmoid-like probabilities strictly in (0, 1)
    pred = jax.nn.sigmoid(jax.random.normal(k1, (B, C, H, W), jnp.float32))
    pred = jnp.clip(pred, 1e-4, 1.0 - 1e-4)

    # gt: gaussian-splatted heatmap in [0, 1] with some exact 1.0 peaks
    gt = jax.random.uniform(k2, (B, C, H, W), jnp.float32)
    peak = jax.random.uniform(k3, (B, C, H, W)) > 0.98
    gt = jnp.where(peak, 1.0, gt * 0.95)

    # mask over (B, H, W)
    mask = (jax.random.uniform(jax.random.PRNGKey(7), (B, H, W)) > 0.3).astype(
        jnp.float32)

    out_masked = jax.block_until_ready(focal_loss_centernet(pred, gt, mask))
    out_nomask = jax.block_until_ready(focal_loss_centernet(pred, gt, None))

    ref_masked = _reference_jax(pred, gt, mask)
    ref_nomask = _reference_jax(pred, gt, None)

    assert jnp.allclose(out_masked, ref_masked, rtol=1e-5, atol=1e-5), (
        out_masked, ref_masked)
    assert jnp.allclose(out_nomask, ref_nomask, rtol=1e-5, atol=1e-5), (
        out_nomask, ref_nomask)

    # Also check a bf16 input path (upcast happens inside the kernel).
    out_bf16 = jax.block_until_ready(
        focal_loss_centernet(pred.astype(jnp.bfloat16), gt, mask))
    assert jnp.allclose(out_bf16, ref_masked, rtol=3e-2, atol=3e-2), (
        out_bf16, ref_masked)

    print("KERNEL_OK")
</pallas_src>

<mosaic_0001>
module attributes {stable_mosaic.version = 11 : i64} {
  func.func @_focal_kernel(%arg0: i32, %arg1: i32, %arg2: memref<1x4x256xf32, #tpu.memory_space<vmem>>, %arg3: memref<1x4x256xf32, #tpu.memory_space<vmem>>, %arg4: memref<1x1x256xf32, #tpu.memory_space<vmem>>, %arg5: memref<1x1x8x128xf32, #tpu.memory_space<vmem>>) attributes {dimension_semantics = [#tpu.dimension_semantics<parallel>, #tpu.dimension_semantics<parallel>], iteration_bounds = array<i64: 2, 1>, scalar_prefetch = 0 : i64, scratch_operands = 0 : i64, tpu.core_type = #tpu.core_type<tc>, window_params = [{transform_indices = @transform_0, window_bounds = array<i64: 1, 4, 256>}, {transform_indices = @transform_1, window_bounds = array<i64: 1, 4, 256>}, {transform_indices = @transform_2, window_bounds = array<i64: 1, 1, 256>}, {transform_indices = @transform_3, window_bounds = array<i64: 1, 1, 8, 128>}]} {
    %c0 = arith.constant 0 : index
    %c0_0 = arith.constant 0 : index
    %c0_1 = arith.constant 0 : index
    %0 = vector.load %arg2[%c0, %c0_0, %c0_1] : memref<1x4x256xf32, #tpu.memory_space<vmem>>, vector<1x4x256xf32>
    %c0_2 = arith.constant 0 : index
    %c0_3 = arith.constant 0 : index
    %c0_4 = arith.constant 0 : index
    %1 = vector.load %arg3[%c0_2, %c0_3, %c0_4] : memref<1x4x256xf32, #tpu.memory_space<vmem>>, vector<1x4x256xf32>
    %c0_5 = arith.constant 0 : index
    %c0_6 = arith.constant 0 : index
    %c0_7 = arith.constant 0 : index
    %2 = vector.load %arg4[%c0_5, %c0_6, %c0_7] : memref<1x1x256xf32, #tpu.memory_space<vmem>>, vector<1x1x256xf32>
    %cst = arith.constant 1.000000e+00 : f32
    %3 = vector.broadcast %cst : f32 to vector<1x4x256xf32>
    %4 = arith.cmpf oeq, %1, %3 : vector<1x4x256xf32>
    %5 = arith.extui %4 : vector<1x4x256xi1> to vector<1x4x256xi32>
    %6 = arith.sitofp %5 : vector<1x4x256xi32> to vector<1x4x256xf32>
    %cst_8 = arith.constant 1.000000e+00 : f32
    %7 = vector.broadcast %cst_8 : f32 to vector<1x4x256xf32>
    %8 = arith.cmpf olt, %1, %7 : vector<1x4x256xf32>
    %9 = arith.extui %8 : vector<1x4x256xi1> to vector<1x4x256xi32>
    %10 = arith.sitofp %9 : vector<1x4x256xi32> to vector<1x4x256xf32>
    %cst_9 = arith.constant 1.000000e+00 : f32
    %11 = vector.broadcast %cst_9 : f32 to vector<1x4x256xf32>
    %12 = arith.subf %11, %1 : vector<1x4x256xf32>
    %13 = arith.mulf %12, %12 : vector<1x4x256xf32>
    %14 = arith.mulf %13, %13 : vector<1x4x256xf32>
    %cst_10 = arith.constant 1.000000e+00 : f32
    %15 = vector.broadcast %cst_10 : f32 to vector<1x4x256xf32>
    %16 = arith.subf %15, %0 : vector<1x4x256xf32>
    %cst_11 = arith.constant 1.000000e+00 : f32
    %17 = vector.broadcast %cst_11 : f32 to vector<1x4x256xf32>
    %18 = arith.cmpf oeq, %1, %17 : vector<1x4x256xf32>
    %19 = arith.select %18, %0, %16 : vector<1x4x256xi1>, vector<1x4x256xf32>
    %20 = math.log %19 : vector<1x4x256xf32>
    %21 = vector.broadcast %2 : vector<1x1x256xf32> to vector<1x4x256xf32>
    %22 = arith.mulf %6, %21 : vector<1x4x256xf32>
    %23 = vector.broadcast %2 : vector<1x1x256xf32> to vector<1x4x256xf32>
    %24 = arith.mulf %10, %23 : vector<1x4x256xf32>
    %25 = arith.mulf %16, %16 : vector<1x4x256xf32>
    %26 = arith.mulf %20, %25 : vector<1x4x256xf32>
    %27 = arith.mulf %26, %22 : vector<1x4x256xf32>
    %28 = arith.mulf %0, %0 : vector<1x4x256xf32>
    %29 = arith.mulf %20, %28 : vector<1x4x256xf32>
    %30 = arith.mulf %29, %14 : vector<1x4x256xf32>
    %31 = arith.mulf %30, %24 : vector<1x4x256xf32>
    %32 = vector.shape_cast %27 : vector<1x4x256xf32> to vector<1x1x4x256xf32>
    %cst_12 = arith.constant dense<0.000000e+00> : vector<1xf32>
    %33 = vector.multi_reduction <add>, %32, %cst_12 [1, 2, 3] : vector<1x1x4x256xf32> to vector<1xf32>
    %34 = vector.shape_cast %33 : vector<1xf32> to vector<1x1x1x1xf32>
    %35 = vector.extract %34[0, 0, 0, 0] : f32 from vector<1x1x1x1xf32>
    %36 = vector.shape_cast %31 : vector<1x4x256xf32> to vector<1x1x4x256xf32>
    %cst_13 = arith.constant dense<0.000000e+00> : vector<1xf32>
    %37 = vector.multi_reduction <add>, %36, %cst_13 [1, 2, 3] : vector<1x1x4x256xf32> to vector<1xf32>
    %38 = vector.shape_cast %37 : vector<1xf32> to vector<1x1x1x1xf32>
    %39 = vector.extract %38[0, 0, 0, 0] : f32 from vector<1x1x1x1xf32>
    %40 = vector.shape_cast %22 : vector<1x4x256xf32> to vector<1x1x4x256xf32>
    %cst_14 = arith.constant dense<0.000000e+00> : vector<1xf32>
    %41 = vector.multi_reduction <add>, %40, %cst_14 [1, 2, 3] : vector<1x1x4x256xf32> to vector<1xf32>
    %42 = vector.shape_cast %41 : vector<1xf32> to vector<1x1x1x1xf32>
    %43 = vector.extract %42[0, 0, 0, 0] : f32 from vector<1x1x1x1xf32>
    %44 = tpu.iota {dimensions = array<i32: 0>} : vector<8x128xi32>
    %c0_i32 = arith.constant 0 : i32
    %45 = vector.broadcast %c0_i32 : i32 to vector<8x128xi32>
    %46 = arith.cmpi eq, %44, %45 : vector<8x128xi32>
    %c1_i32 = arith.constant 1 : i32
    %47 = vector.broadcast %c1_i32 : i32 to vector<8x128xi32>
    %48 = arith.cmpi eq, %44, %47 : vector<8x128xi32>
    %c2_i32 = arith.constant 2 : i32
    %49 = vector.broadcast %c2_i32 : i32 to vector<8x128xi32>
    %50 = arith.cmpi eq, %44, %49 : vector<8x128xi32>
    %cst_15 = arith.constant 0.000000e+00 : f32
    %51 = vector.broadcast %43 : f32 to vector<8x128xf32>
    %52 = vector.broadcast %cst_15 : f32 to vector<8x128xf32>
    %53 = arith.select %50, %51, %52 : vector<8x128xi1>, vector<8x128xf32>
    %54 = vector.broadcast %39 : f32 to vector<8x128xf32>
    %55 = arith.select %48, %54, %53 : vector<8x128xi1>, vector<8x128xf32>
    %56 = vector.broadcast %35 : f32 to vector<8x128xf32>
    %57 = arith.select %46, %56, %55 : vector<8x128xi1>, vector<8x128xf32>
    %c0_16 = arith.constant 0 : index
    %c0_17 = arith.constant 0 : index
    %c0_18 = arith.constant 0 : index
    %c0_19 = arith.constant 0 : index
    %58 = vector.load %arg5[%c0_16, %c0_17, %c0_18, %c0_19] : memref<1x1x8x128xf32, #tpu.memory_space<vmem>>, vector<1x1x8x128xf32>
    %59 = vector.shape_cast %58 : vector<1x1x8x128xf32> to vector<8x128xf32>
    %60 = vector.shape_cast %57 : vector<8x128xf32> to vector<1x1x8x128xf32>
    tpu.vector_store %arg5[%c0_16, %c0_17, %c0_18, %c0_19], %60 {strides = array<i32>} : memref<1x1x8x128xf32, #tpu.memory_space<vmem>>, vector<1x1x8x128xf32>,
    return
  }
  func.func @transform_0(%arg0: i32, %arg1: i32) -> (i32, i32, i32) {
    %c0_i32 = arith.constant 0 : i32
    %c0_i32_0 = arith.constant 0 : i32
    return %arg0, %arg1, %c0_i32 : i32, i32, i32
  }
  func.func @transform_1(%arg0: i32, %arg1: i32) -> (i32, i32, i32) {
    %c0_i32 = arith.constant 0 : i32
    %c0_i32_0 = arith.constant 0 : i32
    return %arg0, %arg1, %c0_i32 : i32, i32, i32
  }
  func.func @transform_2(%arg0: i32, %arg1: i32) -> (i32, i32, i32) {
    %c0_i32 = arith.constant 0 : i32
    %c0_i32_0 = arith.constant 0 : i32
    %c0_i32_1 = arith.constant 0 : i32
    return %arg0, %c0_i32, %c0_i32_0 : i32, i32, i32
  }
  func.func @transform_3(%arg0: i32, %arg1: i32) -> (i32, i32, i32, i32) {
    %c0_i32 = arith.constant 0 : i32
    %c0_i32_0 = arith.constant 0 : i32
    %c0_i32_1 = arith.constant 0 : i32
    return %arg0, %arg1, %c0_i32, %c0_i32_0 : i32, i32, i32, i32
  }
}

</mosaic_0001>

<llo_original>
// kernel: tpu_custom_call.1
$region0: #{tpu_custom_call.1}
  #allocation0 [shape = 'u32[]', space=smem, size = 0x4, offset = 0x4, fixed_abs, tag = 'smem constant byte address 0x4 - core index']
  #allocation1 [shape = 'u32[72,128]{1,0:T(1,128)}', space=vmem, size = 0x9000, scoped, tag = 'internal scratch']
  %s0 = inlined_call_operand.hbm [shape: f32[2,4,256], index: 0, kind: input, shape index: {}]
  %s1 = inlined_call_operand.hbm [shape: f32[2,4,256], index: 1, kind: input, shape index: {}]
  %s2 = inlined_call_operand.hbm [shape: f32[2,1,256], index: 2, kind: input, shape index: {}]
  %s3 = inlined_call_operand.hbm [shape: f32[2,1,8,128], index: 3, kind: output, shape index: {}]
  %s4 = sld [smem:[#allocation0]]
  $region57: #{tpu_custom_call.1} parent=0
    _
  %s6 = ssub.s32 1, %s4
  %s7 = scalar_select 0, %s6, %s4
  $region1: #{tpu_custom_call.1} parent=0
    #allocation2 [shape = 'u8[8192]{0}', space=vmem, size = 0x2000, scoped, tag = 'input window, operand 0']
    #allocation3 [shape = 's32[2]{0}', space=sflag, size = 0x8, scoped, tag = 'scoped memory for tpu_custom_call.1']
    #allocation4 [shape = 's32[2]{0}', space=sflag, size = 0x8, scoped, tag = 'scoped memory for tpu_custom_call.1']
    #allocation5 [shape = 'u8[8192]{0}', space=vmem, size = 0x2000, scoped, tag = 'input window, operand 1']
    #allocation6 [shape = 's32[2]{0}', space=sflag, size = 0x8, scoped, tag = 'scoped memory for tpu_custom_call.1']
    #allocation7 [shape = 'u8[2048]{0}', space=vmem, size = 0x800, scoped, tag = 'input window, operand 2']
    #allocation8 [shape = 'u8[8192]{0}', space=vmem, size = 0x2000, scoped, tag = 'output window, operand 0']
    %8 = vsyncpa [#allocation3], 0
    %s9 = scalar_lea.sflag [#allocation3], 1
    %10 = vsyncpa %s9, 0
    %11 = vsyncpa [#allocation6], 0
    %s12 = scalar_lea.sflag [#allocation6], 1
    %13 = vsyncpa %s12, 0
    %14 = vsyncpa [#allocation4], 0
    %s15 = scalar_lea.sflag [#allocation4], 1
    %16 = vsyncpa %s15, 0
    loop: start=0, step=1, limit=4
    $region2: #{tpu_custom_call.1} parent=1 // loop_pre_header
      _
    $region3: #{tpu_custom_call.1} parent=1 // loop_header
      %s18 = sphi 0, %s22
      %p19 = scmp.ge.s32.totalorder %s18, 4
      %s25 = sphi 0, %s37
      %s26 = sphi 0, %s33
      %s27 = sphi 0, %s25
      %s28 = sphi 0, %s26
      %s29 = sphi 0, %s27
      %s30 = sphi 0, %s28
      %s42 = sphi 0, %s44
      %s45 = sphi 0, %s42
      %s46 = sphi 0, %s45
      %s62 = sphi 0, %s46
      %s70 = sphi 0, %s72
      %s73 = sphi 0, %s70
      %s74 = sphi 0, %s73
      %s90 = sphi 0, %s74
      %s96 = sphi 0, %s98
      %s99 = sphi 0, %s96
      %s100 = sphi 0, %s99
      %s116 = sphi 0, %s100
      %s124 = sphi 0, %s126
      %s127 = sphi 0, %s124
      %s128 = sphi 0, %s127
      %s144 = sphi 0, %s128
    $region4: #{tpu_custom_call.1} parent=1 // loop_header_branch
      %21 = sbr.rel (%p19) target = $region8
    $region5: #{tpu_custom_call.1} parent=1 // loop_body
      %s23 = ssub.s32 %s18, 1
      %s24 = ssub.s32 %s18, 2
      %s31 = sadd.s32 1, %s26
      %p32 = scmp.ge.s32.totalorder %s31, 1
      %s33 = scalar_select %p32, 0, %s31
      %s34 = sadd.s32 1, %s25
      %s35 = scalar_select %p32, %s34, %s25
      %p36 = scmp.ge.s32.totalorder %s35, 2
      %s37 = scalar_select %p36, 0, %s35
      %s38 = ssub.s32 %s25, %s37
      %s39 = ssub.s32 %s26, %s33
      %s40 = sor.u32 %s38, %s39
      %p41 = scmp.eq.s32.totalorder %s40, 0
      %s43 = sadd.s32 %s42, 1
      %s44 = scalar_select %p41, %s42, %s43
      %p47 = pneg %p41
      %p48 = scmp.eq.s32.totalorder %s18, 1
      %p49 = por %p47, %p48
      %p50 = scmp.ne.s32.totalorder %s42, %s45
      %p51 = scmp.eq.s32.totalorder %s18, 0
      %p52 = por %p50, %p51
      %p53 = scmp.ne.s32.totalorder %s42, %s45
      %p54 = scmp.eq.s32.totalorder %s23, 1
      %p55 = por %p53, %p54
      %p56 = scmp.ne.s32.totalorder %s45, %s46
      %p57 = scmp.eq.s32.totalorder %s23, 0
      %p58 = por %p56, %p57
      %p59 = scmp.ne.s32.totalorder %s45, %s46
      %p60 = scmp.eq.s32.totalorder %s24, 1
      %p61 = por %p59, %p60
      %p63 = scmp.ne.s32.totalorder %s46, %s62
      %p64 = scmp.eq.s32.totalorder %s24, 0
      %p65 = por %p63, %p64
      %s66 = ssub.s32 %s25, %s37
      %s67 = ssub.s32 %s26, %s33
      %s68 = sor.u32 %s66, %s67
      %p69 = scmp.eq.s32.totalorder %s68, 0
      %s71 = sadd.s32 %s70, 1
      %s72 = scalar_select %p69, %s70, %s71
      %p75 = pneg %p69
      %p76 = scmp.eq.s32.totalorder %s18, 1
      %p77 = por %p75, %p76
      %p78 = scmp.ne.s32.totalorder %s70, %s73
      %p79 = scmp.eq.s32.totalorder %s18, 0
      %p80 = por %p78, %p79
      %p81 = scmp.ne.s32.totalorder %s70, %s73
      %p82 = scmp.eq.s32.totalorder %s23, 1
      %p83 = por %p81, %p82
      %p84 = scmp.ne.s32.totalorder %s73, %s74
      %p85 = scmp.eq.s32.totalorder %s23, 0
      %p86 = por %p84, %p85
      %p87 = scmp.ne.s32.totalorder %s73, %s74
      %p88 = scmp.eq.s32.totalorder %s24, 1
      %p89 = por %p87, %p88
      %p91 = scmp.ne.s32.totalorder %s74, %s90
      %p92 = scmp.eq.s32.totalorder %s24, 0
      %p93 = por %p91, %p92
      %s94 = ssub.s32 %s25, %s37
      %p95 = scmp.eq.s32.totalorder %s94, 0
      %s97 = sadd.s32 %s96, 1
      %s98 = scalar_select %p95, %s96, %s97
      %p101 = pneg %p95
      %p102 = scmp.eq.s32.totalorder %s18, 1
      %p103 = por %p101, %p102
      %p104 = scmp.ne.s32.totalorder %s96, %s99
      %p105 = scmp.eq.s32.totalorder %s18, 0
      %p106 = por %p104, %p105
      %p107 = scmp.ne.s32.totalorder %s96, %s99
      %p108 = scmp.eq.s32.totalorder %s23, 1
      %p109 = por %p107, %p108
      %p110 = scmp.ne.s32.totalorder %s99, %s100
      %p111 = scmp.eq.s32.totalorder %s23, 0
      %p112 = por %p110, %p111
      %p113 = scmp.ne.s32.totalorder %s99, %s100
      %p114 = scmp.eq.s32.totalorder %s24, 1
      %p115 = por %p113, %p114
      %p117 = scmp.ne.s32.totalorder %s100, %s116
      %p118 = scmp.eq.s32.totalorder %s24, 0
      %p119 = por %p117, %p118
      %s120 = ssub.s32 %s25, %s37
      %s121 = ssub.s32 %s26, %s33
      %s122 = sor.u32 %s120, %s121
      %p123 = scmp.eq.s32.totalorder %s122, 0
      %s125 = sadd.s32 %s124, 1
      %s126 = scalar_select %p123, %s124, %s125
      %p129 = pneg %p123
      %p130 = scmp.eq.s32.totalorder %s18, 1
      %p131 = por %p129, %p130
      %p132 = scmp.ne.s32.totalorder %s124, %s127
      %p133 = scmp.eq.s32.totalorder %s18, 0
      %p134 = por %p132, %p133
      %p135 = scmp.ne.s32.totalorder %s124, %s127
      %p136 = scmp.eq.s32.totalorder %s23, 1
      %p137 = por %p135, %p136
      %p138 = scmp.ne.s32.totalorder %s127, %s128
      %p139 = scmp.eq.s32.totalorder %s23, 0
      %p140 = por %p138, %p139
      %p141 = scmp.ne.s32.totalorder %s127, %s128
      %p142 = scmp.eq.s32.totalorder %s24, 1
      %p143 = por %p141, %p142
      %p145 = scmp.ne.s32.totalorder %s128, %s144
      %p146 = scmp.eq.s32.totalorder %s24, 0
      %p147 = por %p145, %p146
      %p148 = scmp.le.s32.totalorder 1, %s18
      %p149 = scmp.lt.s32.totalorder %s18, 3
      %p150 = pnand %p148, %p149
      %p151 = pneg %p150
      // Predicated region
      $region9: #{tpu_custom_call.1} parent=5 // pred_check
        _
      $region10: #{tpu_custom_call.1} parent=5 // pred_check_branch
        %153 = sbr.rel (%p150) target = $region12
      $region11: #{tpu_custom_call.1} parent=5 // pred_region
        %s154 = ssub.s32 %s18, 1
      $region12: #{tpu_custom_call.1} parent=5 // pred_fallthru
        _
      %p155 = scmp.lt.s32.totalorder %s18, 2
      // Predicated region
      $region13: #{tpu_custom_call.1} parent=5 // pred_check
        %p156 = pneg %p155
      $region14: #{tpu_custom_call.1} parent=5 // pred_check_branch
        %158 = sbr.rel (%p156) target = $region16
      $region15: #{tpu_custom_call.1} parent=5 // pred_region
        // Predicated region
        $region17: #{tpu_custom_call.1} parent=15 // pred_check
          %p159 = pneg %p52
        $region18: #{tpu_custom_call.1} parent=15 // pred_check_branch
          %161 = sbr.rel (%p159) target = $region20
        $region19: #{tpu_custom_call.1} parent=15 // pred_region
          %s162 = sand.u32 %s42, 1
          %s163 = scalar_lea.sflag [#allocation3], %s162
          %s164 = sand.u32 %s42, 1
          %s165 = smul.addr %s164, 8
          %s166 = scalar_lea.vmem [#allocation2], %s165
          %168 = vsyncadd %s163, 0
          %s169 = smul.addr %s26, 2
          %s170 = smul.addr %s25, 2
          %s171 = sadd.s32 %s169, %s170
          %s172 = smul.addr %s171, 4
          %s173 = scalar_lea.hbm %s0, %s172
          %s175 = sshll.u32 %s173, 4
          %s176 = int_to_ptr.hbm [resolvable:$true] %s175
          %s177 = sshll.u32 %s166, 4
          %s178 = int_to_ptr.vmem [resolvable:$true] %s177
          %180 = dma.hbm_to_vmem [thread:$0]  %s176, 128, %s178, %s163
        $region20: #{tpu_custom_call.1} parent=15 // pred_fallthru
          _
        // Predicated region
        $region21: #{tpu_custom_call.1} parent=15 // pred_check
          %p181 = pneg %p80
        $region22: #{tpu_custom_call.1} parent=15 // pred_check_branch
          %183 = sbr.rel (%p181) target = $region24
        $region23: #{tpu_custom_call.1} parent=15 // pred_region
          %s184 = sand.u32 %s18, 1
          %s185 = scalar_lea.sflag [#allocation6], %s184
          %s186 = sand.u32 %s70, 1
          %s187 = smul.addr %s186, 8
          %s188 = scalar_lea.vmem [#allocation5], %s187
          %190 = vsyncadd %s185, 0
          %s191 = smul.addr %s26, 2
          %s192 = smul.addr %s25, 2
          %s193 = sadd.s32 %s191, %s192
          %s194 = smul.addr %s193, 4
          %s195 = scalar_lea.hbm %s1, %s194
          %s197 = sshll.u32 %s195, 4
          %s198 = int_to_ptr.hbm [resolvable:$true] %s197
          %s199 = sshll.u32 %s188, 4
          %s200 = int_to_ptr.vmem [resolvable:$true] %s199
          %202 = dma.hbm_to_vmem [thread:$0]  %s198, 128, %s200, %s185
        $region24: #{tpu_custom_call.1} parent=15 // pred_fallthru
          _
        // Predicated region
        $region25: #{tpu_custom_call.1} parent=15 // pred_check
          %p203 = pneg %p106
        $region26: #{tpu_custom_call.1} parent=15 // pred_check_branch
          %205 = sbr.rel (%p203) target = $region28
        $region27: #{tpu_custom_call.1} parent=15 // pred_region
          %s206 = sand.u32 %s18, 1
          %s207 = scalar_lea.sflag [#allocation6], %s206
          %s208 = sand.u32 %s96, 1
          %s209 = smul.addr %s208, 2
          %s210 = scalar_lea.vmem [#allocation7], %s209
          %212 = vsyncadd %s207, 0
          %s213 = smul.addr %s25, 2
          %s214 = scalar_lea.hbm %s2, %s213
          %s216 = sshll.u32 %s214, 4
          %s217 = int_to_ptr.hbm [resolvable:$true] %s216
          %s218 = sshll.u32 %s210, 4
          %s219 = int_to_ptr.vmem [resolvable:$true] %s218
          %221 = dma.hbm_to_vmem [thread:$0]  %s217, 32, %s219, %s207
        $region28: #{tpu_custom_call.1} parent=15 // pred_fallthru
          _
      $region16: #{tpu_custom_call.1} parent=5 // pred_fallthru
        _
      %p222 = scmp.le.s32.totalorder 1, %s18
      %p223 = scmp.lt.s32.totalorder %s18, 3
      %p224 = pnand %p222, %p223
      %p225 = pneg %p224
      // Predicated region
      $region29: #{tpu_custom_call.1} parent=5 // pred_check
        _
      $region30: #{tpu_custom_call.1} parent=5 // pred_check_branch
        %227 = sbr.rel (%p224) target = $region32
      $region31: #{tpu_custom_call.1} parent=5 // pred_region
        %s228 = ssub.s32 %s18, 1
        %s229 = sand.u32 %s45, 1
        %s230 = scalar_lea.sflag [#allocation3], %s229
        %s231 = sand.u32 %s45, 1
        %s232 = smul.addr %s231, 8
        %s233 = scalar_lea.vmem [#allocation2], %s232
        // Predicated region
        $region33: #{tpu_custom_call.1} parent=31 // pred_check
          %p234 = pneg %p58
        $region34: #{tpu_custom_call.1} parent=31 // pred_check_branch
          %236 = sbr.rel (%p234) target = $region36
        $region35: #{tpu_custom_call.1} parent=31 // pred_region
          %238 = dma.done %s230, 128
        $region36: #{tpu_custom_call.1} parent=31 // pred_fallthru
          _
        %s239 = sand.u32 %s23, 1
        %s240 = scalar_lea.sflag [#allocation6], %s239
        %s241 = sand.u32 %s73, 1
        %s242 = smul.addr %s241, 8
        %s243 = scalar_lea.vmem [#allocation5], %s242
        // Predicated region
        $region37: #{tpu_custom_call.1} parent=31 // pred_check
          %p244 = pneg %p86
        $region38: #{tpu_custom_call.1} parent=31 // pred_check_branch
          %246 = sbr.rel (%p244) target = $region40
        $region39: #{tpu_custom_call.1} parent=31 // pred_region
          %248 = dma.done %s240, 128
        $region40: #{tpu_custom_call.1} parent=31 // pred_fallthru
          _
        %s249 = sand.u32 %s23, 1
        %s250 = scalar_lea.sflag [#allocation6], %s249
        %s251 = sand.u32 %s99, 1
        %s252 = smul.addr %s251, 2
        %s253 = scalar_lea.vmem [#allocation7], %s252
        // Predicated region
        $region41: #{tpu_custom_call.1} parent=31 // pred_check
          %p254 = pneg %p112
        $region42: #{tpu_custom_call.1} parent=31 // pred_check_branch
          %256 = sbr.rel (%p254) target = $region44
        $region43: #{tpu_custom_call.1} parent=31 // pred_region
          %258 = dma.done %s250, 32
        $region44: #{tpu_custom_call.1} parent=31 // pred_fallthru
          _
        %s259 = sand.u32 %s45, 1
        %s260 = scalar_lea.sflag [#allocation3], %s259
        %s261 = sand.u32 %s45, 1
        %s262 = smul.addr %s261, 8
        %s263 = scalar_lea.vmem [#allocation2], %s262
        %p264 = pneg %p58
        %p265 = pneg %p55
        %s266 = sand.u32 %s23, 1
        %s267 = scalar_lea.sflag [#allocation6], %s266
        %s268 = sand.u32 %s73, 1
        %s269 = smul.addr %s268, 8
        %s270 = scalar_lea.vmem [#allocation5], %s269
        %p271 = pneg %p86
        %p272 = pneg %p83
        %s273 = sand.u32 %s23, 1
        %s274 = scalar_lea.sflag [#allocation6], %s273
        %s275 = sand.u32 %s99, 1
        %s276 = smul.addr %s275, 2
        %s277 = scalar_lea.vmem [#allocation7], %s276
        %p278 = pneg %p112
        %p279 = pneg %p109
        %p280 = pneg %p140
        %p281 = pneg %p137
        %s282 = sand.u32 %s127, 1
        %s283 = scalar_lea.sflag [#allocation4], %s282
        %s284 = sand.u32 %s127, 1
        %s285 = smul.addr %s284, 8
        %s286 = scalar_lea.vmem [#allocation8], %s285
        %v287 = vld [vmem:[%s233] sm:$0xff]
        %v288 = vld [vmem:[%s243] sm:$0xff]
        %v289 = vld [vmem:[%s253] sm:$0x3]
        %vm290 = vcmp.eq.f32.partialorder %v288, 1.0
        %v291 = vsel %vm290, 1, 0
        %v292 = vcvt.s32.f32 %v291
        %vm293 = vcmp.lt.f32.partialorder %v288, 1.0
        %v294 = vsel %vm293, 1, 0
        %v295 = vcvt.s32.f32 %v294
        %v296 = vsub.f32 1.0, %v288
        %v297 = vmul.f32 %v296, %v296
        %v298 = vmul.f32 %v297, %v297
        %v299 = vsub.f32 1.0, %v287
        %v300 = vsel %vm290, %v287, %v299
        %v301 = vlog2.pop %v300
        %v302 = vmul.f32 %v301, 0.6931472
        %v304 = vperm.slane %v289, 0
        %v305 = vperm.slane %v289, 1
        %v306 = vrot.slane %v305, 4
        %vm307 = vcmask 1043456
        %v308 = vsel %vm307, %v304, %v306
        %v310 = vmul.f32 %v292, %v308
        %v311 = vmul.f32 %v295, %v308
        %v312 = vmul.f32 %v299, %v299
        %v313 = vmul.f32 %v302, %v312
        %v314 = vmul.f32 %v313, %v310
        %v315 = vmul.f32 %v287, %v287
        %v316 = vmul.f32 %v302, %v315
        %v317 = vmul.f32 %v316, %v298
        %v318 = vmul.f32 %v317, %v311
        %320 = vst [vmem:[#allocation1] ss:$2 sm:$0xff] %v314
        %v321 = vld.sshfl [vmem:[#allocation1] sm:$0xff pattern:$0x75316420]
        %v322 = vld.sshfl [vmem:[#allocation1 + $0x8] sm:$0xff pattern:$0x75316420]
        %v325 = vsel %vm307, %v321, 0.0
        %v326 = vsel %vm307, %v322, 0.0
        %v327 = vadd.f32 %v325, %v326
        %328 = vadd.xlane.f32.xlu0 %v327
        %v329 = vpop.xlane.xlu0 %328
        %v330 = vrot.slane %v329, 4
        %v331 = vadd.f32 %v329, %v330
        %v332 = vrot.slane %v331, 2
        %v333 = vadd.f32 %v331, %v332
        %v334 = vrot.slane %v333, 1
        %v335 = vadd.f32 %v333, %v334
        %s336 = vtos %v335
        %338 = vst [vmem:[#allocation1] ss:$2 sm:$0xff] %v318
        %v339 = vld.sshfl [vmem:[#allocation1] sm:$0xff pattern:$0x75316420]
        %v340 = vld.sshfl [vmem:[#allocation1 + $0x8] sm:$0xff pattern:$0x75316420]
        %v343 = vsel %vm307, %v339, 0.0
        %v344 = vsel %vm307, %v340, 0.0
        %v345 = vadd.f32 %v343, %v344
        %346 = vadd.xlane.f32.xlu0 %v345
        %v347 = vpop.xlane.xlu0 %346
        %v348 = vrot.slane %v347, 4
        %v349 = vadd.f32 %v347, %v348
        %v350 = vrot.slane %v349, 2
        %v351 = vadd.f32 %v349, %v350
        %v352 = vrot.slane %v351, 1
        %v353 = vadd.f32 %v351, %v352
        %s354 = vtos %v353
        %356 = vst [vmem:[#allocation1] ss:$2 sm:$0xff] %v310
        %v357 = vld.sshfl [vmem:[#allocation1] sm:$0xff pattern:$0x75316420]
        %v358 = vld.sshfl [vmem:[#allocation1 + $0x8] sm:$0xff pattern:$0x75316420]
        %v361 = vsel %vm307, %v357, 0.0
        %v362 = vsel %vm307, %v358, 0.0
        %v363 = vadd.f32 %v361, %v362
        %364 = vadd.xlane.f32.xlu0 %v363
        %v365 = vpop.xlane.xlu0 %364
        %v366 = vrot.slane %v365, 4
        %v367 = vadd.f32 %v365, %v366
        %v368 = vrot.slane %v367, 2
        %v369 = vadd.f32 %v367, %v368
        %v370 = vrot.slane %v369, 1
        %v371 = vadd.f32 %v369, %v370
        %s372 = vtos %v371
        %v373 = vlaneseq
        %v374 = vshrl.u32 %v373, 7
        %vm375 = vcmp.eq.s32.totalorder %v374, 0
        %vm376 = vcmp.eq.s32.totalorder %v374, 1
        %vm377 = vcmp.eq.s32.totalorder %v374, 2
        %v378 = vstv %s372
        %v379 = vsel %vm377, %v378, 0.0
        %v380 = vstv %s354
        %v381 = vsel %vm376, %v380, %v379
        %v382 = vstv %s336
        %v383 = vsel %vm375, %v382, %v381
        %384 = vst [vmem:[%s286] sm:$0xff] %v383
        %s385 = sand.u32 %s127, 1
        %s386 = scalar_lea.sflag [#allocation4], %s385
        %s387 = sand.u32 %s127, 1
        %s388 = smul.addr %s387, 8
        %s389 = scalar_lea.vmem [#allocation8], %s388
        // Predicated region
        $region45: #{tpu_custom_call.1} parent=31 // pred_check
          %p390 = pneg %p137
        $region46: #{tpu_custom_call.1} parent=31 // pred_check_branch
          %392 = sbr.rel (%p390) target = $region48
        $region47: #{tpu_custom_call.1} parent=31 // pred_region
          %394 = vsyncadd %s386, 0
          %s395 = sadd.s32 %s28, %s27
          %s396 = smul.addr %s395, 8
          %s397 = scalar_lea.hbm %s3, %s396
          %s399 = sshll.u32 %s389, 4
          %s400 = int_to_ptr.vmem [resolvable:$true] %s399
          %s401 = sshll.u32 %s397, 4
          %s402 = int_to_ptr.hbm [resolvable:$true] %s401
          %404 = dma.vmem_to_hbm [thread:$0]  %s400, 128, %s402, %s386
        $region48: #{tpu_custom_call.1} parent=31 // pred_fallthru
          _
      $region32: #{tpu_custom_call.1} parent=5 // pred_fallthru
        _
      %p405 = scmp.le.s32.totalorder 2, %s18
      // Predicated region
      $region49: #{tpu_custom_call.1} parent=5 // pred_check
        %p406 = pneg %p405
      $region50: #{tpu_custom_call.1} parent=5 // pred_check_branch
        %408 = sbr.rel (%p406) target = $region52
      $region51: #{tpu_custom_call.1} parent=5 // pred_region
        %s409 = ssub.s32 %s18, 2
        // Predicated region
        $region53: #{tpu_custom_call.1} parent=51 // pred_check
          %p410 = pneg %p143
        $region54: #{tpu_custom_call.1} parent=51 // pred_check_branch
          %412 = sbr.rel (%p410) target = $region56
        $region55: #{tpu_custom_call.1} parent=51 // pred_region
          %s413 = sand.u32 %s128, 1
          %s414 = scalar_lea.sflag [#allocation4], %s413
          %s415 = sand.u32 %s128, 1
          %s416 = smul.addr %s415, 8
          %s417 = scalar_lea.vmem [#allocation8], %s416
          %419 = dma.done %s414, 128
        $region56: #{tpu_custom_call.1} parent=51 // pred_fallthru
          _
      $region52: #{tpu_custom_call.1} parent=5 // pred_fallthru
        _
    $region6: #{tpu_custom_call.1} parent=1 // loop_footer
      %s22 = sadd.s32 1, %s18
    $region7: #{tpu_custom_call.1} parent=1 // loop_footer_branch
      %17 = sbr.rel target = $region3
    $region8: #{tpu_custom_call.1} parent=1 // loop_exit
      _
    %420 = vsyncpa [#allocation3], 1
    %s421 = scalar_lea.sflag [#allocation3], 1
    %422 = vsyncpa %s421, 1
    %423 = vsyncpa [#allocation6], 1
    %s424 = scalar_lea.sflag [#allocation6], 1
    %425 = vsyncpa %s424, 1
    %426 = vsyncpa [#allocation4], 1
    %s427 = scalar_lea.sflag [#allocation4], 1
    %428 = vsyncpa %s427, 1

</llo_original>
